<compile_context>
chip_gen: v7x
topology: tpu7x:2x2x1
jax: 0.10.0
libtpu: 0.0.40
codegen_flags: <defaults>
</compile_context>

<pallas_src>
import functools

import jax
import jax.numpy as jnp
from jax.experimental import pallas as pl
from jax.experimental.pallas import tpu as pltpu

D_IN, D_HID, D_OUT = 784, 30, 10


def _mlp_kernel(x_ref, w1_ref, b1_ref, w2_ref, b2_ref, o_ref, *, cast_bf16):
    """Fused forward for one batch tile: matmul + bias + ReLU + matmul + bias."""
    x = x_ref[...]
    w1 = w1_ref[...]
    if cast_bf16:
        # bf16 MXU inputs, f32 accumulation: avoids slow multi-pass f32 matmul with
        # narrow N=30 and leaves the kernel HBM-bound on streaming x.
        if x.dtype != jnp.bfloat16:
            x = x.astype(jnp.bfloat16)
        if w1.dtype != jnp.bfloat16:
            w1 = w1.astype(jnp.bfloat16)
    h = jnp.dot(x, w1, preferred_element_type=jnp.float32) + b1_ref[...]
    h = jnp.maximum(h, 0.0)
    # Second matmul is tiny (K=30); keep f32.
    y = jnp.dot(h, w2_ref[...], preferred_element_type=jnp.float32) + b2_ref[...]
    o_ref[...] = y.astype(o_ref.dtype)


def _round_up(x, m):
    return ((x + m - 1) // m) * m


@functools.partial(jax.jit, static_argnames=("tile_b", "cast_bf16"))
def shallow_nn_forward(x, w1, b1, w2, b2, *, tile_b=2048, cast_bf16=True):
    """x: (B, 784); w1: (784, 30); b1: (1, 30); w2: (30, 10); b2: (1, 10)."""
    B = x.shape[0]
    tile_b = _round_up(int(tile_b), 8)

    # Tile selection:
    #  - cap at tile_b (multiple of 8, satisfies the sublane constraint),
    #  - force >= 2 grid steps for B > tile so the 'parallel' batch axis can use
    #    both TensorCores on v7x,
    #  - small batches collapse to a single full block (block == array dims).
    tb = min(tile_b, _round_up(pl.cdiv(B, 2), 8))
    if tb >= B:
        tb = B
    grid = (pl.cdiv(B, tb),)

    cost = pl.CostEstimate(
        flops=2 * B * (D_IN * D_HID + D_HID * D_OUT),
        transcendentals=0,
        bytes_accessed=(
            B * D_IN * x.dtype.itemsize          # stream x
            + B * D_OUT * 4                      # write y
            + 4 * (D_IN * D_HID + D_HID * D_OUT + D_HID + D_OUT)  # weights/biases
        ),
    )

    out = pl.pallas_call(
        functools.partial(_mlp_kernel, cast_bf16=cast_bf16),
        out_shape=jax.ShapeDtypeStruct((B, D_OUT), jnp.float32),
        grid=grid,
        in_specs=[
            # batch-tiled input: new tile each grid step (auto double-buffered);
            # last partial block handled by Pallas (no HBM-side padding copy).
            pl.BlockSpec((tb, D_IN), lambda i: (i, 0)),
            # weights / biases: constant index_map -> DMA'd once, resident in VMEM
            pl.BlockSpec((D_IN, D_HID), lambda i: (0, 0)),
            pl.BlockSpec((1, D_HID), lambda i: (0, 0)),
            pl.BlockSpec((D_HID, D_OUT), lambda i: (0, 0)),
            pl.BlockSpec((1, D_OUT), lambda i: (0, 0)),
        ],
        out_specs=pl.BlockSpec((tb, D_OUT), lambda i: (i, 0)),
        compiler_params=pltpu.CompilerParams(
            dimension_semantics=("parallel",),
            # 2x2048-row f32 x buffers (~12.8 MiB) + weights + intermediates exceed
            # v5e's 16 MiB default scoped VMEM; 28 MiB is safe on every generation.
            vmem_limit_bytes=28 << 20,
        ),
        cost_estimate=cost,
    )(x, w1, b1, w2, b2)

    return out


def init_params(key):
    """PyTorch nn.Linear default init: U(-1/sqrt(fan_in), +1/sqrt(fan_in)).

    Weights stored pre-transposed as (in, out); biases as (1, out).
    """
    params = []
    for fan_in, fan_out in ((D_IN, D_HID), (D_HID, D_OUT)):
        key, kw, kb = jax.random.split(key, 3)
        bound = 1.0 / (fan_in ** 0.5)
        w = jax.random.uniform(kw, (fan_in, fan_out), jnp.float32, -bound, bound)
        b = jax.random.uniform(kb, (1, fan_out), jnp.float32, -bound, bound)
        params += [w, b]
    return params  # [w1, b1, w2, b2]


def reference_forward(x, w1, b1, w2, b2):
    """Plain-JAX reference for correctness check."""
    h = jnp.maximum(x @ w1 + b1, 0.0)
    return h @ w2 + b2


if __name__ == "__main__":
    key = jax.random.PRNGKey(0)
    key, kx = jax.random.split(key)

    batch = 8
    x = jax.random.normal(kx, (batch, D_IN), dtype=jnp.float32)
    w1, b1, w2, b2 = init_params(key)
    ref = reference_forward(x, w1, b1, w2, b2)

    # Exact-parity path (fp32 MXU), single-block small batch.
    out_f32 = jax.block_until_ready(
        shallow_nn_forward(x, w1, b1, w2, b2, cast_bf16=False))
    assert out_f32.shape == (batch, D_OUT), out_f32.shape
    assert jnp.allclose(out_f32, ref, atol=1e-4, rtol=1e-4)

    # Default fast path (bf16 MXU inputs, f32 accumulation): looser tolerance.
    out_bf16 = jax.block_until_ready(shallow_nn_forward(x, w1, b1, w2, b2))
    assert out_bf16.shape == (batch, D_OUT), out_bf16.shape
    assert jnp.allclose(out_bf16, ref, atol=2e-2, rtol=2e-2)

    # Multi-tile path: grid > 1, partial last block, no HBM-side padding copy.
    big_batch = 1000  # not a multiple of the tile -> exercises partial-block path
    key, kbig = jax.random.split(key)
    xb = jax.random.normal(kbig, (big_batch, D_IN), dtype=jnp.float32)
    ref_b = reference_forward(xb, w1, b1, w2, b2)

    out_b = jax.block_until_ready(
        shallow_nn_forward(xb, w1, b1, w2, b2, tile_b=256, cast_bf16=False))
    assert out_b.shape == (big_batch, D_OUT), out_b.shape
    assert jnp.allclose(out_b, ref_b, atol=1e-4, rtol=1e-4)

    out_b2 = jax.block_until_ready(shallow_nn_forward(xb, w1, b1, w2, b2))
    assert out_b2.shape == (big_batch, D_OUT), out_b2.shape
    assert jnp.allclose(out_b2, ref_b, atol=2e-2, rtol=2e-2)

    print("KERNEL_OK")
</pallas_src>

<mosaic_0001>
module attributes {stable_mosaic.version = 11 : i64} {
  func.func @_mlp_kernel(%arg0: i32, %arg1: memref<8x784xf32, #tpu.memory_space<vmem>>, %arg2: memref<784x30xf32, #tpu.memory_space<vmem>>, %arg3: memref<1x30xf32, #tpu.memory_space<vmem>>, %arg4: memref<30x10xf32, #tpu.memory_space<vmem>>, %arg5: memref<1x10xf32, #tpu.memory_space<vmem>>, %arg6: memref<8x10xf32, #tpu.memory_space<vmem>>) attributes {dimension_semantics = [#tpu.dimension_semantics<parallel>], iteration_bounds = array<i64: 1>, scalar_prefetch = 0 : i64, scratch_operands = 0 : i64, tpu.core_type = #tpu.core_type<tc>, window_params = [{transform_indices = @transform_0, window_bounds = array<i64: 8, 784>}, {pipeline_mode = #tpu.pipeline_mode<synchronous>, transform_indices = @transform_1, window_bounds = array<i64: 784, 30>}, {pipeline_mode = #tpu.pipeline_mode<synchronous>, transform_indices = @transform_2, window_bounds = array<i64: 1, 30>}, {pipeline_mode = #tpu.pipeline_mode<synchronous>, transform_indices = @transform_3, window_bounds = array<i64: 30, 10>}, {pipeline_mode = #tpu.pipeline_mode<synchronous>, transform_indices = @transform_4, window_bounds = array<i64: 1, 10>}, {transform_indices = @transform_5, window_bounds = array<i64: 8, 10>}]} {
    %c0 = arith.constant 0 : index
    %c0_0 = arith.constant 0 : index
    %0 = vector.load %arg1[%c0, %c0_0] : memref<8x784xf32, #tpu.memory_space<vmem>>, vector<8x784xf32>
    %c0_1 = arith.constant 0 : index
    %c0_2 = arith.constant 0 : index
    %1 = vector.load %arg2[%c0_1, %c0_2] : memref<784x30xf32, #tpu.memory_space<vmem>>, vector<784x30xf32>
    %cst = arith.constant dense<0.000000e+00> : vector<8x30xf32>
    %2 = tpu.matmul %0, %1, %cst {dimension_numbers = #tpu.dot_dimension_numbers<[1], [0], [0], [1], [0, 0, 1, 1], [], []>} : vector<8x784xf32>, vector<784x30xf32>, vector<8x30xf32> -> vector<8x30xf32>
    %c0_3 = arith.constant 0 : index
    %c0_4 = arith.constant 0 : index
    %3 = vector.load %arg3[%c0_3, %c0_4] : memref<1x30xf32, #tpu.memory_space<vmem>>, vector<1x30xf32>
    %4 = vector.broadcast %3 : vector<1x30xf32> to vector<8x30xf32>
    %5 = arith.addf %2, %4 : vector<8x30xf32>
    %cst_5 = arith.constant 0.000000e+00 : f32
    %6 = vector.broadcast %cst_5 : f32 to vector<8x30xf32>
    %7 = arith.maximumf %5, %6 : vector<8x30xf32>
    %c0_6 = arith.constant 0 : index
    %c0_7 = arith.constant 0 : index
    %8 = vector.load %arg4[%c0_6, %c0_7] : memref<30x10xf32, #tpu.memory_space<vmem>>, vector<30x10xf32>
    %cst_8 = arith.constant dense<0.000000e+00> : vector<8x10xf32>
    %9 = tpu.matmul %7, %8, %cst_8 {dimension_numbers = #tpu.dot_dimension_numbers<[1], [0], [0], [1], [0, 0, 1, 1], [], []>} : vector<8x30xf32>, vector<30x10xf32>, vector<8x10xf32> -> vector<8x10xf32>
    %c0_9 = arith.constant 0 : index
    %c0_10 = arith.constant 0 : index
    %10 = vector.load %arg5[%c0_9, %c0_10] : memref<1x10xf32, #tpu.memory_space<vmem>>, vector<1x10xf32>
    %11 = vector.broadcast %10 : vector<1x10xf32> to vector<8x10xf32>
    %12 = arith.addf %9, %11 : vector<8x10xf32>
    %c0_11 = arith.constant 0 : index
    %c0_12 = arith.constant 0 : index
    %13 = vector.load %arg6[%c0_11, %c0_12] : memref<8x10xf32, #tpu.memory_space<vmem>>, vector<8x10xf32>
    tpu.vector_store %arg6[%c0_11, %c0_12], %12 {strides = array<i32>} : memref<8x10xf32, #tpu.memory_space<vmem>>, vector<8x10xf32>,
    return
  }
  func.func @transform_0(%arg0: i32) -> (i32, i32) {
    %c0_i32 = arith.constant 0 : i32
    %c0_i32_0 = arith.constant 0 : i32
    return %arg0, %c0_i32 : i32, i32
  }
  func.func @transform_1(%arg0: i32) -> (i32, i32) {
    %c0_i32 = arith.constant 0 : i32
    %c0_i32_0 = arith.constant 0 : i32
    %c0_i32_1 = arith.constant 0 : i32
    return %c0_i32, %c0_i32_0 : i32, i32
  }
  func.func @transform_2(%arg0: i32) -> (i32, i32) {
    %c0_i32 = arith.constant 0 : i32
    %c0_i32_0 = arith.constant 0 : i32
    %c0_i32_1 = arith.constant 0 : i32
    return %c0_i32, %c0_i32_0 : i32, i32
  }
  func.func @transform_3(%arg0: i32) -> (i32, i32) {
    %c0_i32 = arith.constant 0 : i32
    %c0_i32_0 = arith.constant 0 : i32
    %c0_i32_1 = arith.constant 0 : i32
    return %c0_i32, %c0_i32_0 : i32, i32
  }
  func.func @transform_4(%arg0: i32) -> (i32, i32) {
    %c0_i32 = arith.constant 0 : i32
    %c0_i32_0 = arith.constant 0 : i32
    %c0_i32_1 = arith.constant 0 : i32
    return %c0_i32, %c0_i32_0 : i32, i32
  }
  func.func @transform_5(%arg0: i32) -> (i32, i32) {
    %c0_i32 = arith.constant 0 : i32
    %c0_i32_0 = arith.constant 0 : i32
    return %arg0, %c0_i32 : i32, i32
  }
}

</mosaic_0001>

<llo_original>
// kernel: shallow_nn_forward.1
$region0: #{shallow_nn_forward.1}
  #allocation0 [shape = 'u32[]', space=smem, size = 0x4, offset = 0x4, fixed_abs, tag = 'smem constant byte address 0x4 - core index']
  #allocation1 [shape = 'u32[144,128]{1,0:T(1,128)}', space=vmem, size = 0x12000, scoped, tag = 'internal scratch']
  %s0 = inlined_call_operand.vmem [shape: f32[8,784], index: 0, kind: input, shape index: {}]
  %s1 = inlined_call_operand.vmem [shape: f32[784,30], index: 1, kind: input, shape index: {}]
  %s2 = inlined_call_operand.vmem [shape: f32[1,30], index: 2, kind: input, shape index: {}]
  %s3 = inlined_call_operand.vmem [shape: f32[30,10], index: 3, kind: input, shape index: {}]
  %s4 = inlined_call_operand.vmem [shape: f32[1,10], index: 4, kind: input, shape index: {}]
  %s5 = inlined_call_operand.hbm [shape: f32[8,10], index: 5, kind: output, shape index: {}]
  %s6 = sld [smem:[#allocation0]]
  $region30: #{shallow_nn_forward.1} parent=0
    _
  %s8 = ssub.s32 1, %s6
  %s9 = scalar_select 0, %s8, %s6
  $region1: #{shallow_nn_forward.1} parent=0
    #allocation2 [shape = 'u8[4096]{0}', space=vmem, size = 0x1000, scoped, tag = 'output window, operand 0, single buffered']
    #allocation3 [shape = 's32[1]{0}', space=sflag, size = 0x4, scoped, tag = 'scoped memory for shallow_nn_forward.1']
    %10 = vsyncpa [#allocation3], 0
    // Predicated region
    $region2: #{shallow_nn_forward.1} parent=1 // pred_check
      _
    $region3: #{shallow_nn_forward.1} parent=1 // pred_check_branch
      %12 = sbr.rel (0) target = $region5
    $region4: #{shallow_nn_forward.1} parent=1 // pred_region
      _
    $region5: #{shallow_nn_forward.1} parent=1 // pred_fallthru
      _
    // Predicated region
    $region6: #{shallow_nn_forward.1} parent=1 // pred_check
      _
    $region7: #{shallow_nn_forward.1} parent=1 // pred_check_branch
      %14 = sbr.rel (0) target = $region9
    $region8: #{shallow_nn_forward.1} parent=1 // pred_region
      _
    $region9: #{shallow_nn_forward.1} parent=1 // pred_fallthru
      _
    // Predicated region
    $region10: #{shallow_nn_forward.1} parent=1 // pred_check
      _
    $region11: #{shallow_nn_forward.1} parent=1 // pred_check_branch
      %16 = sbr.rel (0) target = $region13
    $region12: #{shallow_nn_forward.1} parent=1 // pred_region
      _
    $region13: #{shallow_nn_forward.1} parent=1 // pred_fallthru
      _
    // Predicated region
    $region14: #{shallow_nn_forward.1} parent=1 // pred_check
      _
    $region15: #{shallow_nn_forward.1} parent=1 // pred_check_branch
      %18 = sbr.rel (0) target = $region17
    $region16: #{shallow_nn_forward.1} parent=1 // pred_region
      _
    $region17: #{shallow_nn_forward.1} parent=1 // pred_fallthru
      _
    // Predicated region
    $region18: #{shallow_nn_forward.1} parent=1 // pred_check
      _
    $region19: #{shallow_nn_forward.1} parent=1 // pred_check_branch
      %20 = sbr.rel (0) target = $region21
    $region20: #{shallow_nn_forward.1} parent=1 // pred_region
      _
    $region21: #{shallow_nn_forward.1} parent=1 // pred_fallthru
      _
    %v21 = vld [vmem:[%s0] sm:$0xff]
    %v22 = vld [vmem:[%s0 + $0x8] sm:$0xff]
    %v23 = vld [vmem:[%s0 + $0x10] sm:$0xff]
    %v24 = vld [vmem:[%s0 + $0x18] sm:$0xff]
    %v25 = vld [vmem:[%s0 + $0x20] sm:$0xff]
    %v26 = vld [vmem:[%s0 + $0x28] sm:$0xff]
    %v27 = vld [vmem:[%s0 + $0x30] sm:$0xff]
    %v28 = vld [vmem:[%s1] sm:$0xff]
    %v29 = vld [vmem:[%s1 + $0x8] sm:$0xff]
    %v30 = vld [vmem:[%s1 + $0x10] sm:$0xff]
    %v31 = vld [vmem:[%s1 + $0x18] sm:$0xff]
    %v32 = vld [vmem:[%s1 + $0x20] sm:$0xff]
    %v33 = vld [vmem:[%s1 + $0x28] sm:$0xff]
    %v34 = vld [vmem:[%s1 + $0x30] sm:$0xff]
    %v35 = vld [vmem:[%s1 + $0x38] sm:$0xff]
    %v36 = vld [vmem:[%s1 + $0x40] sm:$0xff]
    %v37 = vld [vmem:[%s1 + $0x48] sm:$0xff]
    %v38 = vld [vmem:[%s1 + $0x50] sm:$0xff]
    %v39 = vld [vmem:[%s1 + $0x58] sm:$0xff]
    %v40 = vld [vmem:[%s1 + $0x60] sm:$0xff]
    %v41 = vld [vmem:[%s1 + $0x68] sm:$0xff]
    %v42 = vld [vmem:[%s1 + $0x70] sm:$0xff]
    %v43 = vld [vmem:[%s1 + $0x78] sm:$0xff]
    %v44 = vld [vmem:[%s1 + $0x80] sm:$0xff]
    %v45 = vld [vmem:[%s1 + $0x88] sm:$0xff]
    %v46 = vld [vmem:[%s1 + $0x90] sm:$0xff]
    %v47 = vld [vmem:[%s1 + $0x98] sm:$0xff]
    %v48 = vld [vmem:[%s1 + $0xa0] sm:$0xff]
    %v49 = vld [vmem:[%s1 + $0xa8] sm:$0xff]
    %v50 = vld [vmem:[%s1 + $0xb0] sm:$0xff]
    %v51 = vld [vmem:[%s1 + $0xb8] sm:$0xff]
    %v52 = vld [vmem:[%s1 + $0xc0] sm:$0xff]
    %v53 = vld [vmem:[%s1 + $0xc8] sm:$0xff]
    %v54 = vld [vmem:[%s1 + $0xd0] sm:$0xff]
    %v55 = vld [vmem:[%s1 + $0xd8] sm:$0xff]
    %v56 = vld [vmem:[%s1 + $0xe0] sm:$0xff]
    %v57 = vld [vmem:[%s1 + $0xe8] sm:$0xff]
    %v58 = vld [vmem:[%s1 + $0xf0] sm:$0xff]
    %v59 = vld [vmem:[%s1 + $0xf8] sm:$0xff]
    %v60 = vld [vmem:[%s1 + $0x100] sm:$0xff]
    %v61 = vld [vmem:[%s1 + $0x108] sm:$0xff]
    %v62 = vld [vmem:[%s1 + $0x110] sm:$0xff]
    %v63 = vld [vmem:[%s1 + $0x118] sm:$0xff]
    %v64 = vld [vmem:[%s1 + $0x120] sm:$0xff]
    %v65 = vld [vmem:[%s1 + $0x128] sm:$0xff]
    %v66 = vld [vmem:[%s1 + $0x130] sm:$0xff]
    %v67 = vld [vmem:[%s1 + $0x138] sm:$0xff]
    %v68 = vld [vmem:[%s1 + $0x140] sm:$0xff]
    %v69 = vld [vmem:[%s1 + $0x148] sm:$0xff]
    %v70 = vld [vmem:[%s1 + $0x150] sm:$0xff]
    %v71 = vld [vmem:[%s1 + $0x158] sm:$0xff]
    %v72 = vld [vmem:[%s1 + $0x160] sm:$0xff]
    %v73 = vld [vmem:[%s1 + $0x168] sm:$0xff]
    %v74 = vld [vmem:[%s1 + $0x170] sm:$0xff]
    %v75 = vld [vmem:[%s1 + $0x178] sm:$0xff]
    %v76 = vld [vmem:[%s1 + $0x180] sm:$0xff]
    %v77 = vld [vmem:[%s1 + $0x188] sm:$0xff]
    %v78 = vld [vmem:[%s1 + $0x190] sm:$0xff]
    %v79 = vld [vmem:[%s1 + $0x198] sm:$0xff]
    %v80 = vld [vmem:[%s1 + $0x1a0] sm:$0xff]
    %v81 = vld [vmem:[%s1 + $0x1a8] sm:$0xff]
    %v82 = vld [vmem:[%s1 + $0x1b0] sm:$0xff]
    %v83 = vld [vmem:[%s1 + $0x1b8] sm:$0xff]
    %v84 = vld [vmem:[%s1 + $0x1c0] sm:$0xff]
    %v85 = vld [vmem:[%s1 + $0x1c8] sm:$0xff]
    %v86 = vld [vmem:[%s1 + $0x1d0] sm:$0xff]
    %v87 = vld [vmem:[%s1 + $0x1d8] sm:$0xff]
    %v88 = vld [vmem:[%s1 + $0x1e0] sm:$0xff]
    %v89 = vld [vmem:[%s1 + $0x1e8] sm:$0xff]
    %v90 = vld [vmem:[%s1 + $0x1f0] sm:$0xff]
    %v91 = vld [vmem:[%s1 + $0x1f8] sm:$0xff]
    %v92 = vld [vmem:[%s1 + $0x200] sm:$0xff]
    %v93 = vld [vmem:[%s1 + $0x208] sm:$0xff]
    %v94 = vld [vmem:[%s1 + $0x210] sm:$0xff]
    %v95 = vld [vmem:[%s1 + $0x218] sm:$0xff]
    %v96 = vld [vmem:[%s1 + $0x220] sm:$0xff]
    %v97 = vld [vmem:[%s1 + $0x228] sm:$0xff]
    %v98 = vld [vmem:[%s1 + $0x230] sm:$0xff]
    %v99 = vld [vmem:[%s1 + $0x238] sm:$0xff]
    %v100 = vld [vmem:[%s1 + $0x240] sm:$0xff]
    %v101 = vld [vmem:[%s1 + $0x248] sm:$0xff]
    %v102 = vld [vmem:[%s1 + $0x250] sm:$0xff]
    %v103 = vld [vmem:[%s1 + $0x258] sm:$0xff]
    %v104 = vld [vmem:[%s1 + $0x260] sm:$0xff]
    %v105 = vld [vmem:[%s1 + $0x268] sm:$0xff]
    %v106 = vld [vmem:[%s1 + $0x270] sm:$0xff]
    %v107 = vld [vmem:[%s1 + $0x278] sm:$0xff]
    %v108 = vld [vmem:[%s1 + $0x280] sm:$0xff]
    %v109 = vld [vmem:[%s1 + $0x288] sm:$0xff]
    %v110 = vld [vmem:[%s1 + $0x290] sm:$0xff]
    %v111 = vld [vmem:[%s1 + $0x298] sm:$0xff]
    %v112 = vld [vmem:[%s1 + $0x2a0] sm:$0xff]
    %v113 = vld [vmem:[%s1 + $0x2a8] sm:$0xff]
    %v114 = vld [vmem:[%s1 + $0x2b0] sm:$0xff]
    %v115 = vld [vmem:[%s1 + $0x2b8] sm:$0xff]
    %v116 = vld [vmem:[%s1 + $0x2c0] sm:$0xff]
    %v117 = vld [vmem:[%s1 + $0x2c8] sm:$0xff]
    %v118 = vld [vmem:[%s1 + $0x2d0] sm:$0xff]
    %v119 = vld [vmem:[%s1 + $0x2d8] sm:$0xff]
    %v120 = vld [vmem:[%s1 + $0x2e0] sm:$0xff]
    %v121 = vld [vmem:[%s1 + $0x2e8] sm:$0xff]
    %v122 = vld [vmem:[%s1 + $0x2f0] sm:$0xff]
    %v123 = vld [vmem:[%s1 + $0x2f8] sm:$0xff]
    %v124 = vld [vmem:[%s1 + $0x300] sm:$0xff]
    %v125 = vld [vmem:[%s1 + $0x308] sm:$0xff]
    %v126 = vld [vmem:[%s2] sm:$0x1]
    %v128 = vlaneseq
    %v129 = vshrl.u32 %v128, 7
    %v130 = vsub.s32 0, %v129
    %v131 = vrot.slane %v126, %v130
    %vm133 = vcmask 130048
    %v135 = vsel %vm133, %v27, 0
    %137 = vmatprep.subr.mxu0 0.0
    %138 = vmatpush1.msra.mxu0 %v28
    %139 = vmatprep.subr.mxu0 0.0
    %140 = vmatpush1.msra.mxu0 %v29
    %141 = vmatprep.subr.mxu0 0.0
    %142 = vmatpush1.msra.mxu0 %v30
    %143 = vmatprep.subr.mxu0 0.0
    %144 = vmatpush1.msra.mxu0 %v31
    %145 = vmatprep.subr.mxu0 0.0
    %146 = vmatpush1.msra.mxu0 %v32
    %147 = vmatprep.subr.mxu0 0.0
    %148 = vmatpush1.msra.mxu0 %v33
    %149 = vmatprep.subr.mxu0 0.0
    %150 = vmatpush1.msra.mxu0 %v34
    %151 = vmatprep.subr.mxu0 0.0
    %152 = vmatpush1.msra.mxu0 %v35
    %153 = vmatprep.subr.mxu0 0.0
    %154 = vmatpush1.msra.mxu0 %v36
    %155 = vmatprep.subr.mxu0 0.0
    %156 = vmatpush1.msra.mxu0 %v37
    %157 = vmatprep.subr.mxu0 0.0
    %158 = vmatpush1.msra.mxu0 %v38
    %159 = vmatprep.subr.mxu0 0.0
    %160 = vmatpush1.msra.mxu0 %v39
    %161 = vmatprep.subr.mxu0 0.0
    %162 = vmatpush1.msra.mxu0 %v40
    %163 = vmatprep.subr.mxu0 0.0
    %164 = vmatpush1.msra.mxu0 %v41
    %165 = vmatprep.subr.mxu0 0.0
    %166 = vmatpush1.msra.mxu0 %v42
    %167 = vmatprep.subr.mxu0 0.0
    %168 = vmatpush1.msra.mxu0 %v43
    %169 = vmatprep.subr.mxu0 0.0
    %170 = vmatpush1.msra.mxu0 %v44
    %171 = vmatprep.subr.mxu0 0.0
    %172 = vmatpush1.msra.mxu0 %v45
    %173 = vmatprep.subr.mxu0 0.0
    %174 = vmatpush1.msra.mxu0 %v46
    %175 = vmatprep.subr.mxu0 0.0
    %176 = vmatpush1.msra.mxu0 %v47
    %177 = vmatprep.subr.mxu0 0.0
    %178 = vmatpush1.msra.mxu0 %v48
    %179 = vmatprep.subr.mxu0 0.0
    %180 = vmatpush1.msra.mxu0 %v49
    %181 = vmatprep.subr.mxu0 0.0
    %182 = vmatpush1.msra.mxu0 %v50
    %183 = vmatprep.subr.mxu0 0.0
    %184 = vmatpush1.msra.mxu0 %v51
    %185 = vmatprep.subr.mxu0 0.0
    %186 = vmatpush1.msra.mxu0 %v52
    %187 = vmatprep.subr.mxu0 0.0
    %188 = vmatpush1.msra.mxu0 %v53
    %189 = vmatprep.subr.mxu0 0.0
    %190 = vmatpush1.msra.mxu0 %v54
    %191 = vmatprep.subr.mxu0 0.0
    %192 = vmatpush1.msra.mxu0 %v55
    %193 = vmatprep.subr.mxu0 0.0
    %194 = vmatpush1.msra.mxu0 %v56
    %195 = vmatprep.subr.mxu0 0.0
    %196 = vmatpush1.msra.mxu0 %v57
    %197 = vmatprep.subr.mxu0 0.0
    %198 = vmatpush1.msra.mxu0 %v58
    %199 = vmatprep.subr.mxu0 0.0
    %200 = vmatpush1.msra.mxu0 %v59
    %201 = vmatprep.mubr.f32.mxu0 %v22
    %202 = vmatmul.mubr.f32.gmra.mrb[0].mxu0 %v21
    %v203 = vpop.f32.mrb[0].mxu0
    %v204 = vadd.f32 %v131, %v203
    %v205 = vpop.f32.mrb[0].mxu0
    %206 = vdwg.mxu0
    %207 = vmatprep.subr.mxu0 0.0
    %208 = vmatpush1.msra.mxu0 %v60
    %209 = vmatprep.subr.mxu0 0.0
    %210 = vmatpush1.msra.mxu0 %v61
    %211 = vmatprep.subr.mxu0 0.0
    %212 = vmatpush1.msra.mxu0 %v62
    %213 = vmatprep.subr.mxu0 0.0
    %214 = vmatpush1.msra.mxu0 %v63
    %215 = vmatprep.subr.mxu0 0.0
    %216 = vmatpush1.msra.mxu0 %v64
    %217 = vmatprep.subr.mxu0 0.0
    %218 = vmatpush1.msra.mxu0 %v65
    %219 = vmatprep.subr.mxu0 0.0
    %220 = vmatpush1.msra.mxu0 %v66
    %221 = vmatprep.subr.mxu0 0.0
    %222 = vmatpush1.msra.mxu0 %v67
    %223 = vmatprep.subr.mxu0 0.0
    %224 = vmatpush1.msra.mxu0 %v68
    %225 = vmatprep.subr.mxu0 0.0
    %226 = vmatpush1.msra.mxu0 %v69
    %227 = vmatprep.subr.mxu0 0.0
    %228 = vmatpush1.msra.mxu0 %v70
    %229 = vmatprep.subr.mxu0 0.0
    %230 = vmatpush1.msra.mxu0 %v71
    %231 = vmatprep.subr.mxu0 0.0
    %232 = vmatpush1.msra.mxu0 %v72
    %233 = vmatprep.subr.mxu0 0.0
    %234 = vmatpush1.msra.mxu0 %v73
    %235 = vmatprep.subr.mxu0 0.0
    %236 = vmatpush1.msra.mxu0 %v74
    %237 = vmatprep.subr.mxu0 0.0
    %238 = vmatpush1.msra.mxu0 %v75
    %239 = vmatprep.subr.mxu0 0.0
    %240 = vmatpush1.msra.mxu0 %v76
    %241 = vmatprep.subr.mxu0 0.0
    %242 = vmatpush1.msra.mxu0 %v77
    %243 = vmatprep.subr.mxu0 0.0
    %244 = vmatpush1.msra.mxu0 %v78
    %245 = vmatprep.subr.mxu0 0.0
    %246 = vmatpush1.msra.mxu0 %v79
    %247 = vmatprep.subr.mxu0 0.0
    %248 = vmatpush1.msra.mxu0 %v80
    %249 = vmatprep.subr.mxu0 0.0
    %250 = vmatpush1.msra.mxu0 %v81
    %251 = vmatprep.subr.mxu0 0.0
    %252 = vmatpush1.msra.mxu0 %v82
    %253 = vmatprep.subr.mxu0 0.0
    %254 = vmatpush1.msra.mxu0 %v83
    %255 = vmatprep.subr.mxu0 0.0
    %256 = vmatpush1.msra.mxu0 %v84
    %257 = vmatprep.subr.mxu0 0.0
    %258 = vmatpush1.msra.mxu0 %v85
    %259 = vmatprep.subr.mxu0 0.0
    %260 = vmatpush1.msra.mxu0 %v86
    %261 = vmatprep.subr.mxu0 0.0
    %262 = vmatpush1.msra.mxu0 %v87
    %263 = vmatprep.subr.mxu0 0.0
    %264 = vmatpush1.msra.mxu0 %v88
    %265 = vmatprep.subr.mxu0 0.0
    %266 = vmatpush1.msra.mxu0 %v89
    %267 = vmatprep.subr.mxu0 0.0
    %268 = vmatpush1.msra.mxu0 %v90
    %269 = vmatprep.subr.mxu0 0.0
    %270 = vmatpush1.msra.mxu0 %v91
    %271 = vmatprep.mubr.f32.mxu0 %v24
    %272 = vmatmul.mubr.f32.gmra.mrb[0].mxu0 %v23
    %v273 = vpop.f32.mrb[0].mxu0
    %v274 = vadd.f32 %v204, %v273
    %v275 = vpop.f32.mrb[0].mxu0
    %276 = vdwg.mxu0
    %277 = vmatprep.subr.mxu0 0.0
    %278 = vmatpush1.msra.mxu0 %v92
    %279 = vmatprep.subr.mxu0 0.0
    %280 = vmatpush1.msra.mxu0 %v93
    %281 = vmatprep.subr.mxu0 0.0
    %282 = vmatpush1.msra.mxu0 %v94
    %283 = vmatprep.subr.mxu0 0.0
    %284 = vmatpush1.msra.mxu0 %v95
    %285 = vmatprep.subr.mxu0 0.0
    %286 = vmatpush1.msra.mxu0 %v96
    %287 = vmatprep.subr.mxu0 0.0
    %288 = vmatpush1.msra.mxu0 %v97
    %289 = vmatprep.subr.mxu0 0.0
    %290 = vmatpush1.msra.mxu0 %v98
    %291 = vmatprep.subr.mxu0 0.0
    %292 = vmatpush1.msra.mxu0 %v99
    %293 = vmatprep.subr.mxu0 0.0
    %294 = vmatpush1.msra.mxu0 %v100
    %295 = vmatprep.subr.mxu0 0.0
    %296 = vmatpush1.msra.mxu0 %v101
    %297 = vmatprep.subr.mxu0 0.0
    %298 = vmatpush1.msra.mxu0 %v102
    %299 = vmatprep.subr.mxu0 0.0
    %300 = vmatpush1.msra.mxu0 %v103
    %301 = vmatprep.subr.mxu0 0.0
    %302 = vmatpush1.msra.mxu0 %v104
    %303 = vmatprep.subr.mxu0 0.0
    %304 = vmatpush1.msra.mxu0 %v105
    %305 = vmatprep.subr.mxu0 0.0
    %306 = vmatpush1.msra.mxu0 %v106
    %307 = vmatprep.subr.mxu0 0.0
    %308 = vmatpush1.msra.mxu0 %v107
    %309 = vmatprep.subr.mxu0 0.0
    %310 = vmatpush1.msra.mxu0 %v108
    %311 = vmatprep.subr.mxu0 0.0
    %312 = vmatpush1.msra.mxu0 %v109
    %313 = vmatprep.subr.mxu0 0.0
    %314 = vmatpush1.msra.mxu0 %v110
    %315 = vmatprep.subr.mxu0 0.0
    %316 = vmatpush1.msra.mxu0 %v111
    %317 = vmatprep.subr.mxu0 0.0
    %318 = vmatpush1.msra.mxu0 %v112
    %319 = vmatprep.subr.mxu0 0.0
    %320 = vmatpush1.msra.mxu0 %v113
    %321 = vmatprep.subr.mxu0 0.0
    %322 = vmatpush1.msra.mxu0 %v114
    %323 = vmatprep.subr.mxu0 0.0
    %324 = vmatpush1.msra.mxu0 %v115
    %325 = vmatprep.subr.mxu0 0.0
    %326 = vmatpush1.msra.mxu0 %v116
    %327 = vmatprep.subr.mxu0 0.0
    %328 = vmatpush1.msra.mxu0 %v117
    %329 = vmatprep.subr.mxu0 0.0
    %330 = vmatpush1.msra.mxu0 %v118
    %331 = vmatprep.subr.mxu0 0.0
    %332 = vmatpush1.msra.mxu0 %v119
    %333 = vmatprep.subr.mxu0 0.0
    %334 = vmatpush1.msra.mxu0 %v120
    %335 = vmatprep.subr.mxu0 0.0
    %336 = vmatpush1.msra.mxu0 %v121
    %337 = vmatprep.subr.mxu0 0.0
    %338 = vmatpush1.msra.mxu0 %v122
    %339 = vmatprep.subr.mxu0 0.0
    %340 = vmatpush1.msra.mxu0 %v123
    %341 = vmatprep.mubr.f32.mxu0 %v26
    %342 = vmatmul.mubr.f32.gmra.mrb[0].mxu0 %v25
    %v343 = vpop.f32.mrb[0].mxu0
    %v344 = vadd.f32 %v274, %v343
    %v345 = vpop.f32.mrb[0].mxu0
    %346 = vdwg.mxu0
    %347 = vmatprep.subr.mxu0 0.0
    %348 = vmatpush1.msra.mxu0 %v124
    %349 = vmatprep.subr.mxu0 0.0
    %350 = vmatpush1.msra.mxu0 %v125
    %351 = vmatprep.subr.mxu0 0.0
    %352 = vmatpush1.msra.mxu0 0.0
    %353 = vmatprep.subr.mxu0 0.0
    %354 = vmatpush1.msra.mxu0 0.0
    %355 = vmatprep.subr.mxu0 0.0
    %356 = vmatpush1.msra.mxu0 0.0
    %357 = vmatprep.subr.mxu0 0.0
    %358 = vmatpush1.msra.mxu0 0.0
    %359 = vmatprep.subr.mxu0 0.0
    %360 = vmatpush1.msra.mxu0 0.0
    %361 = vmatprep.subr.mxu0 0.0
    %362 = vmatpush1.msra.mxu0 0.0
    %363 = vmatprep.subr.mxu0 0.0
    %364 = vmatpush1.msra.mxu0 0.0
    %365 = vmatprep.subr.mxu0 0.0
    %366 = vmatpush1.msra.mxu0 0.0
    %367 = vmatprep.subr.mxu0 0.0
    %368 = vmatpush1.msra.mxu0 0.0
    %369 = vmatprep.subr.mxu0 0.0
    %370 = vmatpush1.msra.mxu0 0.0
    %371 = vmatprep.subr.mxu0 0.0
    %372 = vmatpush1.msra.mxu0 0.0
    %373 = vmatprep.subr.mxu0 0.0
    %374 = vmatpush1.msra.mxu0 0.0
    %375 = vmatprep.subr.mxu0 0.0
    %376 = vmatpush1.msra.mxu0 0.0
    %377 = vmatprep.subr.mxu0 0.0
    %378 = vmatpush1.msra.mxu0 0.0
    %379 = vmatprep.subr.mxu0 0.0
    %380 = vmatpush1.msra.mxu0 0.0
    %381 = vmatprep.subr.mxu0 0.0
    %382 = vmatpush1.msra.mxu0 0.0
    %383 = vmatprep.subr.mxu0 0.0
    %384 = vmatpush1.msra.mxu0 0.0
    %385 = vmatprep.subr.mxu0 0.0
    %386 = vmatpush1.msra.mxu0 0.0
    %387 = vmatprep.subr.mxu0 0.0
    %388 = vmatpush1.msra.mxu0 0.0
    %389 = vmatprep.subr.mxu0 0.0
    %390 = vmatpush1.msra.mxu0 0.0
    %391 = vmatprep.subr.mxu0 0.0
    %392 = vmatpush1.msra.mxu0 0.0
    %393 = vmatprep.subr.mxu0 0.0
    %394 = vmatpush1.msra.mxu0 0.0
    %395 = vmatprep.subr.mxu0 0.0
    %396 = vmatpush1.msra.mxu0 0.0
    %397 = vmatprep.subr.mxu0 0.0
    %398 = vmatpush1.msra.mxu0 0.0
    %399 = vmatprep.subr.mxu0 0.0
    %400 = vmatpush1.msra.mxu0 0.0
    %401 = vmatprep.subr.mxu0 0.0
    %402 = vmatpush1.msra.mxu0 0.0
    %403 = vmatprep.subr.mxu0 0.0
    %404 = vmatpush1.msra.mxu0 0.0
    %405 = vmatprep.subr.mxu0 0.0
    %406 = vmatpush1.msra.mxu0 0.0
    %407 = vmatprep.subr.mxu0 0.0
    %408 = vmatpush1.msra.mxu0 0.0
    %409 = vmatprep.subr.mxu0 0.0
    %410 = vmatpush1.msra.mxu0 0.0
    %411 = vmatprep.mubr.f32.mxu0 0.0
    %412 = vmatmul.mubr.f32.gmra.mrb[0].mxu0 %v135
    %v413 = vpop.f32.mrb[0].mxu0
    %v414 = vadd.f32 %v344, %v413
    %v415 = vpop.f32.mrb[0].mxu0
    %416 = vdwg.mxu0
    %v417 = vmax.f32 %v414, 0.0
    %v418 = vld [vmem:[%s3] sm:$0xff]
    %v419 = vld [vmem:[%s3 + $0x8] sm:$0xff]
    %v420 = vld [vmem:[%s3 + $0x10] sm:$0xff]
    %v421 = vld [vmem:[%s3 + $0x18] sm:$0x3f]
    %v422 = vld [vmem:[%s4] sm:$0x1]
    %v424 = vlaneseq
    %v425 = vshrl.u32 %v424, 7
    %v426 = vsub.s32 0, %v425
    %v427 = vrot.slane %v422, %v426
    %vm429 = vcmask 244736
    %v431 = vsel %vm429, %v417, 0
    %vm433 = vcmask 1045504
    %v435 = vsel %vm433, %v421, 0
    %437 = vmatprep.subr.mxu0 0.0
    %438 = vmatpush1.msra.mxu0 %v418
    %439 = vmatprep.subr.mxu0 0.0
    %440 = vmatpush1.msra.mxu0 %v419
    %441 = vmatprep.subr.mxu0 0.0
    %442 = vmatpush1.msra.mxu0 %v420
    %443 = vmatprep.subr.mxu0 0.0
    %444 = vmatpush1.msra.mxu0 %v435
    %445 = vmatprep.subr.mxu0 0.0
    %446 = vmatpush1.msra.mxu0 0.0
    %447 = vmatprep.subr.mxu0 0.0
    %448 = vmatpush1.msra.mxu0 0.0
    %449 = vmatprep.subr.mxu0 0.0
    %450 = vmatpush1.msra.mxu0 0.0
    %451 = vmatprep.subr.mxu0 0.0
    %452 = vmatpush1.msra.mxu0 0.0
    %453 = vmatprep.subr.mxu0 0.0
    %454 = vmatpush1.msra.mxu0 0.0
    %455 = vmatprep.subr.mxu0 0.0
    %456 = vmatpush1.msra.mxu0 0.0
    %457 = vmatprep.subr.mxu0 0.0
    %458 = vmatpush1.msra.mxu0 0.0
    %459 = vmatprep.subr.mxu0 0.0
    %460 = vmatpush1.msra.mxu0 0.0
    %461 = vmatprep.subr.mxu0 0.0
    %462 = vmatpush1.msra.mxu0 0.0
    %463 = vmatprep.subr.mxu0 0.0
    %464 = vmatpush1.msra.mxu0 0.0
    %465 = vmatprep.subr.mxu0 0.0
    %466 = vmatpush1.msra.mxu0 0.0
    %467 = vmatprep.subr.mxu0 0.0
    %468 = vmatpush1.msra.mxu0 0.0
    %469 = vmatprep.subr.mxu0 0.0
    %470 = vmatpush1.msra.mxu0 0.0
    %471 = vmatprep.subr.mxu0 0.0
    %472 = vmatpush1.msra.mxu0 0.0
    %473 = vmatprep.subr.mxu0 0.0
    %474 = vmatpush1.msra.mxu0 0.0
    %475 = vmatprep.subr.mxu0 0.0
    %476 = vmatpush1.msra.mxu0 0.0
    %477 = vmatprep.subr.mxu0 0.0
    %478 = vmatpush1.msra.mxu0 0.0
    %479 = vmatprep.subr.mxu0 0.0
    %480 = vmatpush1.msra.mxu0 0.0
    %481 = vmatprep.subr.mxu0 0.0
    %482 = vmatpush1.msra.mxu0 0.0
    %483 = vmatprep.subr.mxu0 0.0
    %484 = vmatpush1.msra.mxu0 0.0
    %485 = vmatprep.subr.mxu0 0.0
    %486 = vmatpush1.msra.mxu0 0.0
    %487 = vmatprep.subr.mxu0 0.0
    %488 = vmatpush1.msra.mxu0 0.0
    %489 = vmatprep.subr.mxu0 0.0
    %490 = vmatpush1.msra.mxu0 0.0
    %491 = vmatprep.subr.mxu0 0.0
    %492 = vmatpush1.msra.mxu0 0.0
    %493 = vmatprep.subr.mxu0 0.0
    %494 = vmatpush1.msra.mxu0 0.0
    %495 = vmatprep.subr.mxu0 0.0
    %496 = vmatpush1.msra.mxu0 0.0
    %497 = vmatprep.subr.mxu0 0.0
    %498 = vmatpush1.msra.mxu0 0.0
    %499 = vmatprep.subr.mxu0 0.0
    %500 = vmatpush1.msra.mxu0 0.0
    %501 = vmatprep.mubr.f32.mxu0 0.0
    %502 = vmatmul.mubr.f32.gmra.mrb[0].mxu0 %v431
    %v503 = vpop.f32.mrb[0].mxu0
    %v504 = vadd.f32 %v427, %v503
    %v505 = vpop.f32.mrb[0].mxu0
    %506 = vdwg.mxu0
    %vm507 = vcmask 80896
    %508 = vst.msk [vmem:[#allocation2] sm:$0xff] %vm507, %v504
    // Predicated region
    $region22: #{shallow_nn_forward.1} parent=1 // pred_check
      _
    $region23: #{shallow_nn_forward.1} parent=1 // pred_check_branch
      %510 = sbr.rel (0) target = $region25
    $region24: #{shallow_nn_forward.1} parent=1 // pred_region
      %s512 = ssub.s32 128, 128
      %513 = vsyncadd [#allocation3], %s512
      %s515 = sshll.u32 [#allocation2], 4
      %s516 = int_to_ptr.vmem [resolvable:$true] %s515
      %518 = dma.vmem_to_hbm [thread:$0]  %s516, 128, %s5, [#allocation3]
    $region25: #{shallow_nn_forward.1} parent=1 // pred_fallthru
      _
    // Predicated region
    $region26: #{shallow_nn_forward.1} parent=1 // pred_check
      _
    $region27: #{shallow_nn_forward.1} parent=1 // pred_check_branch
      %520 = sbr.rel (0) target = $region29
    $region28: #{shallow_nn_forward.1} parent=1 // pred_region
      %521 = dma.done [#allocation3], 128
    $region29: #{shallow_nn_forward.1} parent=1 // pred_fallthru
      _
    %522 = vsyncpa [#allocation3], 1

</llo_original>
